<compile_context>
chip_gen: v6e
topology: v6e:2x2x1
jax: 0.10.0
libtpu: 0.0.40
codegen_flags: <defaults>
</compile_context>

<pallas_src>
import functools

import jax
import jax.numpy as jnp
from jax import lax
from jax.experimental import pallas as pl
from jax.experimental.pallas import tpu as pltpu


def _shift_lanes(a, off, hw):
    """Static lane shift: b[:, i] = a[:, (i + off) % hw]; `off` may be negative."""
    m = off % hw
    if m == 0:
        return a
    return jnp.concatenate([a[:, m:], a[:, :m]], axis=1)


def fire_kernel(x_ref, wsq_ref, wcomb_ref, mask_ref, bias_ref, out_ref, *, H, W):
    HW = H * W

    # ---- squeeze: 1x1 conv (no bias) + ReLU  ->  (C_sq, HW), f32 acc ----
    s = jnp.maximum(
        jnp.dot(wsq_ref[...], x_ref[0], preferred_element_type=jnp.float32),
        0.0)

    # ---- lane-dense im2col of the squeeze activations: (9*C_sq, HW) ----
    # Each tap is a static lane shift of `s`; border masks ({0,1}, per output
    # pixel) zero the contributions that fall outside the padded-by-1 image,
    # including anything that wrapped around the HW lane axis.
    mask = mask_ref[...]                       # (9, HW) f32
    patches = []
    for k in range(9):
        dh, dw = k // 3 - 1, k % 3 - 1
        if dh == 0 and dw == 0:                # center tap: no shift, no mask
            patches.append(s)
        else:
            shifted = _shift_lanes(s, dh * W + dw, HW)
            patches.append(shifted * mask[k:k + 1, :])
    # 9 sublane-aligned (C_sq, HW) f32 pieces -> cheap vreg stack.
    im2col = jnp.concatenate(patches, axis=0)

    # ---- fused expand1x1 + expand3x3 + concat: one MXU matmul (K = 9*C_sq) ----
    o = jnp.dot(wcomb_ref[...], im2col.astype(wcomb_ref.dtype),
                preferred_element_type=jnp.float32)
    o = jnp.maximum(o + bias_ref[...], 0.0)    # bias (C_out, 1) bcasts over lanes
    out_ref[0] = o.astype(out_ref.dtype)       # unmasked lane-dense (C_out, HW) store


def fire_pallas(x_nchw, w_sq, w_e1, b_e1, w_e3, b_e3, *, mxu_dtype=None):
    """x_nchw: (N, C_in, H, W); PyTorch OIHW conv weights; returns NCHW output."""
    N, C_in, H, W = x_nchw.shape
    C_sq = w_sq.shape[0]
    C_e1 = w_e1.shape[0]
    C_e3 = w_e3.shape[0]
    C_out = C_e1 + C_e3
    HW = H * W
    if mxu_dtype is None:
        mxu_dtype = x_nchw.dtype

    # ---- layout plumbing (plain JAX, outside the kernel) ----
    # NCHW flattened == channel-major, spatial-on-lanes: reshape only.
    x = x_nchw.reshape(N, C_in, HW).astype(mxu_dtype)

    wsq = w_sq[:, :, 0, 0].astype(mxu_dtype)                 # (C_sq, C_in)

    # Combined expand weight: (C_out, 9*C_sq).  Column block k holds the tap-k
    # 3x3 weights in the bottom C_e3 rows; the 1x1 weights sit only in the
    # center-tap (k == 4) columns of the top C_e1 rows.
    we1 = w_e1[:, :, 0, 0]                                   # (C_e1, C_sq)
    col_blocks = []
    for k in range(9):
        kh, kw = divmod(k, 3)
        top = we1 if (kh == 1 and kw == 1) else jnp.zeros((C_e1, C_sq), we1.dtype)
        col_blocks.append(jnp.concatenate([top, w_e3[:, :, kh, kw]], axis=0))
    wcomb = jnp.concatenate(col_blocks, axis=1).astype(mxu_dtype)  # (C_out, 9*C_sq)

    bias = jnp.concatenate([b_e1, b_e3]).reshape(C_out, 1).astype(jnp.float32)

    # Border masks for the 9 taps of the padding=1 3x3 conv (per output pixel).
    r = jnp.arange(H).reshape(H, 1)
    c = jnp.arange(W).reshape(1, W)
    mrows = []
    for k in range(9):
        dh, dw = k // 3 - 1, k % 3 - 1
        m = ((r + dh >= 0) & (r + dh < H) & (c + dw >= 0) & (c + dw < W))
        mrows.append(m.reshape(1, HW))
    mask = jnp.concatenate(mrows, axis=0).astype(jnp.float32)      # (9, HW)

    kernel = functools.partial(fire_kernel, H=H, W=W)

    out = pl.pallas_call(
        kernel,
        out_shape=jax.ShapeDtypeStruct((N, C_out, HW), x_nchw.dtype),
        grid_spec=pltpu.PrefetchScalarGridSpec(
            num_scalar_prefetch=0,
            grid=(N,),
            in_specs=[
                pl.BlockSpec((1, C_in, HW), lambda n: (n, 0, 0)),   # per-image
                pl.BlockSpec((C_sq, C_in), lambda n: (0, 0)),       # resident
                pl.BlockSpec((C_out, 9 * C_sq), lambda n: (0, 0)),  # resident
                pl.BlockSpec((9, HW), lambda n: (0, 0)),            # resident
                pl.BlockSpec((C_out, 1), lambda n: (0, 0)),         # resident
            ],
            out_specs=pl.BlockSpec((1, C_out, HW), lambda n: (n, 0, 0)),
        ),
        compiler_params=pltpu.CompilerParams(
            dimension_semantics=("parallel",)),
    )(x, wsq, wcomb, mask, bias)

    return out.reshape(N, C_out, H, W)


def fire_ref(x, w_sq, w_e1, b_e1, w_e3, b_e3):
    """Pure-JAX reference matching torch semantics (NCHW)."""
    dn = ("NCHW", "OIHW", "NCHW")
    s = jnp.maximum(
        lax.conv_general_dilated(x, w_sq, (1, 1), "VALID",
                                 dimension_numbers=dn), 0.0)
    o1 = jnp.maximum(
        lax.conv_general_dilated(s, w_e1, (1, 1), "VALID",
                                 dimension_numbers=dn)
        + b_e1[None, :, None, None], 0.0)
    o3 = jnp.maximum(
        lax.conv_general_dilated(s, w_e3, (1, 1), ((1, 1), (1, 1)),
                                 dimension_numbers=dn)
        + b_e3[None, :, None, None], 0.0)
    return jnp.concatenate([o1, o3], axis=1)


if __name__ == "__main__":
    # Fire(in_ch=4, squeeze_ch=8, expand1x1_ch=16, expand3x3_ch=16)
    N, C_in, H, W = 2, 4, 16, 16
    C_sq, C_e1, C_e3 = 8, 16, 16

    key = jax.random.PRNGKey(0)
    ks = jax.random.split(key, 6)
    x = jax.random.normal(ks[0], (N, C_in, H, W), jnp.float32)
    w_sq = jax.random.normal(ks[1], (C_sq, C_in, 1, 1), jnp.float32) * 0.2
    w_e1 = jax.random.normal(ks[2], (C_e1, C_sq, 1, 1), jnp.float32) * 0.2
    b_e1 = jax.random.normal(ks[3], (C_e1,), jnp.float32) * 0.1
    w_e3 = jax.random.normal(ks[4], (C_e3, C_sq, 3, 3), jnp.float32) * 0.2
    b_e3 = jax.random.normal(ks[5], (C_e3,), jnp.float32) * 0.1

    ref = fire_ref(x, w_sq, w_e1, b_e1, w_e3, b_e3)

    # f32 path: strict correctness check.
    out = jax.block_until_ready(fire_pallas(x, w_sq, w_e1, b_e1, w_e3, b_e3))
    assert out.shape == (N, C_e1 + C_e3, H, W), out.shape
    assert jnp.allclose(out, ref, atol=1e-3, rtol=1e-3), \
        float(jnp.max(jnp.abs(out - ref)))

    # bf16-on-MXU path (v6e/v7x throughput): f32 accumulate, loose tolerance.
    out_bf16 = jax.block_until_ready(
        fire_pallas(x, w_sq, w_e1, b_e1, w_e3, b_e3, mxu_dtype=jnp.bfloat16))
    assert out_bf16.shape == (N, C_e1 + C_e3, H, W), out_bf16.shape
    assert float(jnp.max(jnp.abs(out_bf16 - ref))) < 0.3, \
        float(jnp.max(jnp.abs(out_bf16 - ref)))

    print("KERNEL_OK")
</pallas_src>

<mosaic_0001>
module attributes {stable_mosaic.version = 11 : i64} {
  func.func @fire_kernel(%arg0: i32, %arg1: memref<1x4x256xf32, #tpu.memory_space<vmem>>, %arg2: memref<8x4xf32, #tpu.memory_space<vmem>>, %arg3: memref<32x72xf32, #tpu.memory_space<vmem>>, %arg4: memref<9x256xf32, #tpu.memory_space<vmem>>, %arg5: memref<32x1xf32, #tpu.memory_space<vmem>>, %arg6: memref<1x32x256xf32, #tpu.memory_space<vmem>>) attributes {dimension_semantics = [#tpu.dimension_semantics<parallel>], iteration_bounds = array<i64: 2>, scalar_prefetch = 0 : i64, scratch_operands = 0 : i64, tpu.core_type = #tpu.core_type<tc>, window_params = [{transform_indices = @transform_0, window_bounds = array<i64: 1, 4, 256>}, {pipeline_mode = #tpu.pipeline_mode<synchronous>, transform_indices = @transform_1, window_bounds = array<i64: 8, 4>}, {pipeline_mode = #tpu.pipeline_mode<synchronous>, transform_indices = @transform_2, window_bounds = array<i64: 32, 72>}, {pipeline_mode = #tpu.pipeline_mode<synchronous>, transform_indices = @transform_3, window_bounds = array<i64: 9, 256>}, {pipeline_mode = #tpu.pipeline_mode<synchronous>, transform_indices = @transform_4, window_bounds = array<i64: 32, 1>}, {transform_indices = @transform_5, window_bounds = array<i64: 1, 32, 256>}]} {
    %c0 = arith.constant 0 : index
    %c0_0 = arith.constant 0 : index
    %0 = vector.load %arg2[%c0, %c0_0] : memref<8x4xf32, #tpu.memory_space<vmem>>, vector<8x4xf32>
    %c0_1 = arith.constant 0 : index
    %c0_2 = arith.constant 0 : index
    %c0_3 = arith.constant 0 : index
    %1 = vector.load %arg1[%c0_1, %c0_2, %c0_3] : memref<1x4x256xf32, #tpu.memory_space<vmem>>, vector<1x4x256xf32>
    %2 = vector.shape_cast %1 : vector<1x4x256xf32> to vector<4x256xf32>
    %cst = arith.constant dense<0.000000e+00> : vector<8x256xf32>
    %3 = tpu.matmul %0, %2, %cst {dimension_numbers = #tpu.dot_dimension_numbers<[1], [0], [0], [1], [0, 0, 1, 1], [], []>} : vector<8x4xf32>, vector<4x256xf32>, vector<8x256xf32> -> vector<8x256xf32>
    %cst_4 = arith.constant 0.000000e+00 : f32
    %4 = vector.broadcast %cst_4 : f32 to vector<8x256xf32>
    %5 = arith.maximumf %3, %4 : vector<8x256xf32>
    %c0_5 = arith.constant 0 : index
    %c0_6 = arith.constant 0 : index
    %6 = vector.load %arg4[%c0_5, %c0_6] : memref<9x256xf32, #tpu.memory_space<vmem>>, vector<9x256xf32>
    %7 = vector.extract_strided_slice %5 {offsets = [0, 239], sizes = [8, 17], strides = [1, 1]} : vector<8x256xf32> to vector<8x17xf32>
    %8 = vector.extract_strided_slice %5 {offsets = [0, 0], sizes = [8, 239], strides = [1, 1]} : vector<8x256xf32> to vector<8x239xf32>
    %9 = tpu.concatenate %7, %8 in 1 : vector<8x17xf32>, vector<8x239xf32> -> vector<8x256xf32>
    %10 = vector.extract_strided_slice %6 {offsets = [0, 0], sizes = [1, 256], strides = [1, 1]} : vector<9x256xf32> to vector<1x256xf32>
    %11 = vector.broadcast %10 : vector<1x256xf32> to vector<8x256xf32>
    %12 = arith.mulf %9, %11 : vector<8x256xf32>
    %13 = vector.extract_strided_slice %5 {offsets = [0, 240], sizes = [8, 16], strides = [1, 1]} : vector<8x256xf32> to vector<8x16xf32>
    %14 = vector.extract_strided_slice %5 {offsets = [0, 0], sizes = [8, 240], strides = [1, 1]} : vector<8x256xf32> to vector<8x240xf32>
    %15 = tpu.concatenate %13, %14 in 1 : vector<8x16xf32>, vector<8x240xf32> -> vector<8x256xf32>
    %16 = vector.extract_strided_slice %6 {offsets = [1, 0], sizes = [1, 256], strides = [1, 1]} : vector<9x256xf32> to vector<1x256xf32>
    %17 = vector.broadcast %16 : vector<1x256xf32> to vector<8x256xf32>
    %18 = arith.mulf %15, %17 : vector<8x256xf32>
    %19 = vector.extract_strided_slice %5 {offsets = [0, 241], sizes = [8, 15], strides = [1, 1]} : vector<8x256xf32> to vector<8x15xf32>
    %20 = vector.extract_strided_slice %5 {offsets = [0, 0], sizes = [8, 241], strides = [1, 1]} : vector<8x256xf32> to vector<8x241xf32>
    %21 = tpu.concatenate %19, %20 in 1 : vector<8x15xf32>, vector<8x241xf32> -> vector<8x256xf32>
    %22 = vector.extract_strided_slice %6 {offsets = [2, 0], sizes = [1, 256], strides = [1, 1]} : vector<9x256xf32> to vector<1x256xf32>
    %23 = vector.broadcast %22 : vector<1x256xf32> to vector<8x256xf32>
    %24 = arith.mulf %21, %23 : vector<8x256xf32>
    %25 = vector.extract_strided_slice %5 {offsets = [0, 255], sizes = [8, 1], strides = [1, 1]} : vector<8x256xf32> to vector<8x1xf32>
    %26 = vector.extract_strided_slice %5 {offsets = [0, 0], sizes = [8, 255], strides = [1, 1]} : vector<8x256xf32> to vector<8x255xf32>
    %27 = tpu.concatenate %25, %26 in 1 : vector<8x1xf32>, vector<8x255xf32> -> vector<8x256xf32>
    %28 = vector.extract_strided_slice %6 {offsets = [3, 0], sizes = [1, 256], strides = [1, 1]} : vector<9x256xf32> to vector<1x256xf32>
    %29 = vector.broadcast %28 : vector<1x256xf32> to vector<8x256xf32>
    %30 = arith.mulf %27, %29 : vector<8x256xf32>
    %31 = vector.extract_strided_slice %5 {offsets = [0, 1], sizes = [8, 255], strides = [1, 1]} : vector<8x256xf32> to vector<8x255xf32>
    %32 = vector.extract_strided_slice %5 {offsets = [0, 0], sizes = [8, 1], strides = [1, 1]} : vector<8x256xf32> to vector<8x1xf32>
    %33 = tpu.concatenate %31, %32 in 1 : vector<8x255xf32>, vector<8x1xf32> -> vector<8x256xf32>
    %34 = vector.extract_strided_slice %6 {offsets = [5, 0], sizes = [1, 256], strides = [1, 1]} : vector<9x256xf32> to vector<1x256xf32>
    %35 = vector.broadcast %34 : vector<1x256xf32> to vector<8x256xf32>
    %36 = arith.mulf %33, %35 : vector<8x256xf32>
    %37 = vector.extract_strided_slice %5 {offsets = [0, 15], sizes = [8, 241], strides = [1, 1]} : vector<8x256xf32> to vector<8x241xf32>
    %38 = vector.extract_strided_slice %5 {offsets = [0, 0], sizes = [8, 15], strides = [1, 1]} : vector<8x256xf32> to vector<8x15xf32>
    %39 = tpu.concatenate %37, %38 in 1 : vector<8x241xf32>, vector<8x15xf32> -> vector<8x256xf32>
    %40 = vector.extract_strided_slice %6 {offsets = [6, 0], sizes = [1, 256], strides = [1, 1]} : vector<9x256xf32> to vector<1x256xf32>
    %41 = vector.broadcast %40 : vector<1x256xf32> to vector<8x256xf32>
    %42 = arith.mulf %39, %41 : vector<8x256xf32>
    %43 = vector.extract_strided_slice %5 {offsets = [0, 16], sizes = [8, 240], strides = [1, 1]} : vector<8x256xf32> to vector<8x240xf32>
    %44 = vector.extract_strided_slice %5 {offsets = [0, 0], sizes = [8, 16], strides = [1, 1]} : vector<8x256xf32> to vector<8x16xf32>
    %45 = tpu.concatenate %43, %44 in 1 : vector<8x240xf32>, vector<8x16xf32> -> vector<8x256xf32>
    %46 = vector.extract_strided_slice %6 {offsets = [7, 0], sizes = [1, 256], strides = [1, 1]} : vector<9x256xf32> to vector<1x256xf32>
    %47 = vector.broadcast %46 : vector<1x256xf32> to vector<8x256xf32>
    %48 = arith.mulf %45, %47 : vector<8x256xf32>
    %49 = vector.extract_strided_slice %5 {offsets = [0, 17], sizes = [8, 239], strides = [1, 1]} : vector<8x256xf32> to vector<8x239xf32>
    %50 = vector.extract_strided_slice %5 {offsets = [0, 0], sizes = [8, 17], strides = [1, 1]} : vector<8x256xf32> to vector<8x17xf32>
    %51 = tpu.concatenate %49, %50 in 1 : vector<8x239xf32>, vector<8x17xf32> -> vector<8x256xf32>
    %52 = vector.extract_strided_slice %6 {offsets = [8, 0], sizes = [1, 256], strides = [1, 1]} : vector<9x256xf32> to vector<1x256xf32>
    %53 = vector.broadcast %52 : vector<1x256xf32> to vector<8x256xf32>
    %54 = arith.mulf %51, %53 : vector<8x256xf32>
    %55 = tpu.concatenate %12, %18, %24, %30, %5, %36, %42, %48, %54 in 0 : vector<8x256xf32>, vector<8x256xf32>, vector<8x256xf32>, vector<8x256xf32>, vector<8x256xf32>, vector<8x256xf32>, vector<8x256xf32>, vector<8x256xf32>, vector<8x256xf32> -> vector<72x256xf32>
    %c0_7 = arith.constant 0 : index
    %c0_8 = arith.constant 0 : index
    %56 = vector.load %arg3[%c0_7, %c0_8] : memref<32x72xf32, #tpu.memory_space<vmem>>, vector<32x72xf32>
    %cst_9 = arith.constant dense<0.000000e+00> : vector<32x256xf32>
    %57 = tpu.matmul %56, %55, %cst_9 {dimension_numbers = #tpu.dot_dimension_numbers<[1], [0], [0], [1], [0, 0, 1, 1], [], []>} : vector<32x72xf32>, vector<72x256xf32>, vector<32x256xf32> -> vector<32x256xf32>
    %c0_10 = arith.constant 0 : index
    %c0_11 = arith.constant 0 : index
    %58 = vector.load %arg5[%c0_10, %c0_11] : memref<32x1xf32, #tpu.memory_space<vmem>>, vector<32x1xf32>
    %59 = vector.broadcast %58 : vector<32x1xf32> to vector<32x256xf32>
    %60 = arith.addf %57, %59 : vector<32x256xf32>
    %cst_12 = arith.constant 0.000000e+00 : f32
    %61 = vector.broadcast %cst_12 : f32 to vector<32x256xf32>
    %62 = arith.maximumf %60, %61 : vector<32x256xf32>
    %c0_13 = arith.constant 0 : index
    %c0_14 = arith.constant 0 : index
    %c0_15 = arith.constant 0 : index
    %63 = vector.load %arg6[%c0_13, %c0_14, %c0_15] : memref<1x32x256xf32, #tpu.memory_space<vmem>>, vector<1x32x256xf32>
    %64 = vector.shape_cast %63 : vector<1x32x256xf32> to vector<32x256xf32>
    %65 = vector.shape_cast %62 : vector<32x256xf32> to vector<1x32x256xf32>
    tpu.vector_store %arg6[%c0_13, %c0_14, %c0_15], %65 {strides = array<i32>} : memref<1x32x256xf32, #tpu.memory_space<vmem>>, vector<1x32x256xf32>,
    return
  }
  func.func @transform_0(%arg0: i32) -> (i32, i32, i32) {
    %c0_i32 = arith.constant 0 : i32
    %c0_i32_0 = arith.constant 0 : i32
    %c0_i32_1 = arith.constant 0 : i32
    return %arg0, %c0_i32, %c0_i32_0 : i32, i32, i32
  }
  func.func @transform_1(%arg0: i32) -> (i32, i32) {
    %c0_i32 = arith.constant 0 : i32
    %c0_i32_0 = arith.constant 0 : i32
    %c0_i32_1 = arith.constant 0 : i32
    return %c0_i32, %c0_i32_0 : i32, i32
  }
  func.func @transform_2(%arg0: i32) -> (i32, i32) {
    %c0_i32 = arith.constant 0 : i32
    %c0_i32_0 = arith.constant 0 : i32
    %c0_i32_1 = arith.constant 0 : i32
    return %c0_i32, %c0_i32_0 : i32, i32
  }
  func.func @transform_3(%arg0: i32) -> (i32, i32) {
    %c0_i32 = arith.constant 0 : i32
    %c0_i32_0 = arith.constant 0 : i32
    %c0_i32_1 = arith.constant 0 : i32
    return %c0_i32, %c0_i32_0 : i32, i32
  }
  func.func @transform_4(%arg0: i32) -> (i32, i32) {
    %c0_i32 = arith.constant 0 : i32
    %c0_i32_0 = arith.constant 0 : i32
    %c0_i32_1 = arith.constant 0 : i32
    return %c0_i32, %c0_i32_0 : i32, i32
  }
  func.func @transform_5(%arg0: i32) -> (i32, i32, i32) {
    %c0_i32 = arith.constant 0 : i32
    %c0_i32_0 = arith.constant 0 : i32
    %c0_i32_1 = arith.constant 0 : i32
    return %arg0, %c0_i32, %c0_i32_0 : i32, i32, i32
  }
}

</mosaic_0001>

<llo_original>
// kernel: tpu_custom_call.1
$region0: #{tpu_custom_call.1}
  #allocation0 [shape = 'u32[]', space=smem, size = 0x4, offset = 0x4, fixed_abs, tag = 'smem constant byte address 0x4 - core index']
  #allocation1 [shape = 'u32[144,128]{1,0:T(1,128)}', space=vmem, size = 0x12000, scoped, tag = 'internal scratch']
  %s0 = inlined_call_operand.vmem [shape: f32[2,4,256], index: 0, kind: input, shape index: {}]
  %s1 = inlined_call_operand.vmem [shape: f32[8,4], index: 1, kind: input, shape index: {}]
  %s2 = inlined_call_operand.vmem [shape: f32[32,72], index: 2, kind: input, shape index: {}]
  %s3 = inlined_call_operand.hbm [shape: f32[9,256], index: 3, kind: input, shape index: {}]
  %s4 = inlined_call_operand.vmem [shape: f32[32,1], index: 4, kind: input, shape index: {}]
  %s5 = inlined_call_operand.hbm [shape: f32[2,32,256], index: 5, kind: output, shape index: {}]
  %s6 = sld [smem:[#allocation0]]
  $region57: #{tpu_custom_call.1} parent=0
    _
  %s8 = ssub.s32 1, %s6
  %s9 = scalar_select 0, %s8, %s6
  $region1: #{tpu_custom_call.1} parent=0
    #allocation2 [shape = 'u8[16384]{0}', space=vmem, size = 0x4000, scoped, tag = 'input window, operand 3, single buffered']
    #allocation3 [shape = 's32[2]{0}', space=sflag, size = 0x8, scoped, tag = 'scoped memory for tpu_custom_call.1']
    #allocation4 [shape = 's32[2]{0}', space=sflag, size = 0x8, scoped, tag = 'scoped memory for tpu_custom_call.1']
    #allocation5 [shape = 'u8[65536]{0}', space=vmem, size = 0x10000, scoped, tag = 'output window, operand 0']
    %10 = vsyncpa [#allocation3], 0
    %11 = vsyncpa [#allocation4], 0
    %s12 = scalar_lea.sflag [#allocation4], 1
    %13 = vsyncpa %s12, 0
    loop: start=0, step=1, limit=4
    $region2: #{tpu_custom_call.1} parent=1 // loop_pre_header
      _
    $region3: #{tpu_custom_call.1} parent=1 // loop_header
      %s15 = sphi 0, %s19
      %p16 = scmp.ge.s32.totalorder %s15, 4
      %s25 = sphi 0, %s27
      %s28 = sphi 0, %s25
      %s29 = sphi 0, %s28
      %s45 = sphi 0, %s29
      %s49 = sphi 0, %s49
      %s51 = sphi 0, %s49
      %s52 = sphi 0, %s51
      %s66 = sphi 0, %s52
      %s70 = sphi 0, %s70
      %s72 = sphi 0, %s70
      %s73 = sphi 0, %s72
      %s87 = sphi 0, %s73
      %s91 = sphi 0, %s91
      %s93 = sphi 0, %s91
      %s94 = sphi 0, %s93
      %s108 = sphi 0, %s94
      %s112 = sphi 0, %s112
      %s114 = sphi 0, %s112
      %s115 = sphi 0, %s114
      %s129 = sphi 0, %s115
      %s135 = sphi 0, %s137
      %s138 = sphi 0, %s135
      %s139 = sphi 0, %s138
      %s155 = sphi 0, %s139
    $region4: #{tpu_custom_call.1} parent=1 // loop_header_branch
      %18 = sbr.rel (%p16) target = $region8
    $region5: #{tpu_custom_call.1} parent=1 // loop_body
      %s20 = ssub.s32 %s15, 1
      %s21 = ssub.s32 %s15, 2
      %s22 = sadd.s32 %s15, 1
      %s23 = ssub.s32 %s15, %s22
      %p24 = scmp.eq.s32.totalorder %s23, 0
      %s26 = sadd.s32 %s25, 1
      %s27 = scalar_select %p24, %s25, %s26
      %p30 = pneg %p24
      %p31 = scmp.eq.s32.totalorder %s15, 1
      %p32 = por %p30, %p31
      %p33 = scmp.ne.s32.totalorder %s25, %s28
      %p34 = scmp.eq.s32.totalorder %s15, 0
      %p35 = por %p33, %p34
      %p36 = scmp.ne.s32.totalorder %s25, %s28
      %p37 = scmp.eq.s32.totalorder %s20, 1
      %p38 = por %p36, %p37
      %p39 = scmp.ne.s32.totalorder %s28, %s29
      %p40 = scmp.eq.s32.totalorder %s20, 0
      %p41 = por %p39, %p40
      %p42 = scmp.ne.s32.totalorder %s28, %s29
      %p43 = scmp.eq.s32.totalorder %s21, 1
      %p44 = por %p42, %p43
      %p46 = scmp.ne.s32.totalorder %s29, %s45
      %p47 = scmp.eq.s32.totalorder %s21, 0
      %p48 = por %p46, %p47
      %s50 = sadd.s32 %s49, 1
      %p53 = scmp.eq.s32.totalorder %s15, 1
      %p54 = scmp.ne.s32.totalorder %s49, %s51
      %p55 = scmp.eq.s32.totalorder %s15, 0
      %p56 = por %p54, %p55
      %p57 = scmp.ne.s32.totalorder %s49, %s51
      %p58 = scmp.eq.s32.totalorder %s20, 1
      %p59 = por %p57, %p58
      %p60 = scmp.ne.s32.totalorder %s51, %s52
      %p61 = scmp.eq.s32.totalorder %s20, 0
      %p62 = por %p60, %p61
      %p63 = scmp.ne.s32.totalorder %s51, %s52
      %p64 = scmp.eq.s32.totalorder %s21, 1
      %p65 = por %p63, %p64
      %p67 = scmp.ne.s32.totalorder %s52, %s66
      %p68 = scmp.eq.s32.totalorder %s21, 0
      %p69 = por %p67, %p68
      %s71 = sadd.s32 %s70, 1
      %p74 = scmp.eq.s32.totalorder %s15, 1
      %p75 = scmp.ne.s32.totalorder %s70, %s72
      %p76 = scmp.eq.s32.totalorder %s15, 0
      %p77 = por %p75, %p76
      %p78 = scmp.ne.s32.totalorder %s70, %s72
      %p79 = scmp.eq.s32.totalorder %s20, 1
      %p80 = por %p78, %p79
      %p81 = scmp.ne.s32.totalorder %s72, %s73
      %p82 = scmp.eq.s32.totalorder %s20, 0
      %p83 = por %p81, %p82
      %p84 = scmp.ne.s32.totalorder %s72, %s73
      %p85 = scmp.eq.s32.totalorder %s21, 1
      %p86 = por %p84, %p85
      %p88 = scmp.ne.s32.totalorder %s73, %s87
      %p89 = scmp.eq.s32.totalorder %s21, 0
      %p90 = por %p88, %p89
      %s92 = sadd.s32 %s91, 1
      %p95 = scmp.eq.s32.totalorder %s15, 1
      %p96 = scmp.ne.s32.totalorder %s91, %s93
      %p97 = scmp.eq.s32.totalorder %s15, 0
      %p98 = por %p96, %p97
      %p99 = scmp.ne.s32.totalorder %s91, %s93
      %p100 = scmp.eq.s32.totalorder %s20, 1
      %p101 = por %p99, %p100
      %p102 = scmp.ne.s32.totalorder %s93, %s94
      %p103 = scmp.eq.s32.totalorder %s20, 0
      %p104 = por %p102, %p103
      %p105 = scmp.ne.s32.totalorder %s93, %s94
      %p106 = scmp.eq.s32.totalorder %s21, 1
      %p107 = por %p105, %p106
      %p109 = scmp.ne.s32.totalorder %s94, %s108
      %p110 = scmp.eq.s32.totalorder %s21, 0
      %p111 = por %p109, %p110
      %s113 = sadd.s32 %s112, 1
      %p116 = scmp.eq.s32.totalorder %s15, 1
      %p117 = scmp.ne.s32.totalorder %s112, %s114
      %p118 = scmp.eq.s32.totalorder %s15, 0
      %p119 = por %p117, %p118
      %p120 = scmp.ne.s32.totalorder %s112, %s114
      %p121 = scmp.eq.s32.totalorder %s20, 1
      %p122 = por %p120, %p121
      %p123 = scmp.ne.s32.totalorder %s114, %s115
      %p124 = scmp.eq.s32.totalorder %s20, 0
      %p125 = por %p123, %p124
      %p126 = scmp.ne.s32.totalorder %s114, %s115
      %p127 = scmp.eq.s32.totalorder %s21, 1
      %p128 = por %p126, %p127
      %p130 = scmp.ne.s32.totalorder %s115, %s129
      %p131 = scmp.eq.s32.totalorder %s21, 0
      %p132 = por %p130, %p131
      %s133 = ssub.s32 %s15, %s22
      %p134 = scmp.eq.s32.totalorder %s133, 0
      %s136 = sadd.s32 %s135, 1
      %s137 = scalar_select %p134, %s135, %s136
      %p140 = pneg %p134
      %p141 = scmp.eq.s32.totalorder %s15, 1
      %p142 = por %p140, %p141
      %p143 = scmp.ne.s32.totalorder %s135, %s138
      %p144 = scmp.eq.s32.totalorder %s15, 0
      %p145 = por %p143, %p144
      %p146 = scmp.ne.s32.totalorder %s135, %s138
      %p147 = scmp.eq.s32.totalorder %s20, 1
      %p148 = por %p146, %p147
      %p149 = scmp.ne.s32.totalorder %s138, %s139
      %p150 = scmp.eq.s32.totalorder %s20, 0
      %p151 = por %p149, %p150
      %p152 = scmp.ne.s32.totalorder %s138, %s139
      %p153 = scmp.eq.s32.totalorder %s21, 1
      %p154 = por %p152, %p153
      %p156 = scmp.ne.s32.totalorder %s139, %s155
      %p157 = scmp.eq.s32.totalorder %s21, 0
      %p158 = por %p156, %p157
      %p159 = scmp.le.s32.totalorder 1, %s15
      %p160 = scmp.lt.s32.totalorder %s15, 3
      %p161 = pnand %p159, %p160
      %p162 = pneg %p161
      // Predicated region
      $region9: #{tpu_custom_call.1} parent=5 // pred_check
        _
      $region10: #{tpu_custom_call.1} parent=5 // pred_check_branch
        %164 = sbr.rel (%p161) target = $region12
      $region11: #{tpu_custom_call.1} parent=5 // pred_region
        %s165 = ssub.s32 %s15, 1
        // Predicated region
        $region13: #{tpu_custom_call.1} parent=11 // pred_check
          %p166 = pneg %p62
        $region14: #{tpu_custom_call.1} parent=11 // pred_check_branch
          %168 = sbr.rel (%p166) target = $region16
        $region15: #{tpu_custom_call.1} parent=11 // pred_region
          _
        $region16: #{tpu_custom_call.1} parent=11 // pred_fallthru
          _
        // Predicated region
        $region17: #{tpu_custom_call.1} parent=11 // pred_check
          %p169 = pneg %p83
        $region18: #{tpu_custom_call.1} parent=11 // pred_check_branch
          %171 = sbr.rel (%p169) target = $region20
        $region19: #{tpu_custom_call.1} parent=11 // pred_region
          _
        $region20: #{tpu_custom_call.1} parent=11 // pred_fallthru
          _
        // Predicated region
        $region21: #{tpu_custom_call.1} parent=11 // pred_check
          %p172 = pneg %p104
        $region22: #{tpu_custom_call.1} parent=11 // pred_check_branch
          %174 = sbr.rel (%p172) target = $region24
        $region23: #{tpu_custom_call.1} parent=11 // pred_region
          %s176 = ssub.s32 512, 512
          %177 = vsyncadd [#allocation3], %s176
          %s178 = sshll.u32 [#allocation2], 4
          %s179 = int_to_ptr.vmem [resolvable:$true] %s178
          %184 = dma.hbm_to_vmem [thread:$0]  %s3, 512, %s179, [#allocation3], 256, 256, 16
        $region24: #{tpu_custom_call.1} parent=11 // pred_fallthru
          _
        // Predicated region
        $region25: #{tpu_custom_call.1} parent=11 // pred_check
          %p185 = pneg %p125
        $region26: #{tpu_custom_call.1} parent=11 // pred_check_branch
          %187 = sbr.rel (%p185) target = $region28
        $region27: #{tpu_custom_call.1} parent=11 // pred_region
          _
        $region28: #{tpu_custom_call.1} parent=11 // pred_fallthru
          _
      $region12: #{tpu_custom_call.1} parent=5 // pred_fallthru
        _
      %p188 = scmp.lt.s32.totalorder %s15, 2
      // Predicated region
      $region29: #{tpu_custom_call.1} parent=5 // pred_check
        %p189 = pneg %p188
      $region30: #{tpu_custom_call.1} parent=5 // pred_check_branch
        %191 = sbr.rel (%p189) target = $region32
      $region31: #{tpu_custom_call.1} parent=5 // pred_region
        // Predicated region
        $region33: #{tpu_custom_call.1} parent=31 // pred_check
          %p192 = pneg %p35
        $region34: #{tpu_custom_call.1} parent=31 // pred_check_branch
          %194 = sbr.rel (%p192) target = $region36
        $region35: #{tpu_custom_call.1} parent=31 // pred_region
          %p195 = scmp.lt.s32.totalorder %s15, 1
          %s196 = scalar_select %p195, %s15, 1
          %s197 = smul.addr %s196, 2
          %s198 = smul.addr %s197, 4
          %s199 = scalar_lea.vmem %s0, %s198
        $region36: #{tpu_custom_call.1} parent=31 // pred_fallthru
          _
      $region32: #{tpu_custom_call.1} parent=5 // pred_fallthru
        _
      %p200 = scmp.le.s32.totalorder 1, %s15
      %p201 = scmp.lt.s32.totalorder %s15, 3
      %p202 = pnand %p200, %p201
      %p203 = pneg %p202
      // Predicated region
      $region37: #{tpu_custom_call.1} parent=5 // pred_check
        _
      $region38: #{tpu_custom_call.1} parent=5 // pred_check_branch
        %205 = sbr.rel (%p202) target = $region40
      $region39: #{tpu_custom_call.1} parent=5 // pred_region
        %s206 = ssub.s32 %s15, 1
        // Predicated region
        $region41: #{tpu_custom_call.1} parent=39 // pred_check
          %p207 = pneg %p104
        $region42: #{tpu_custom_call.1} parent=39 // pred_check_branch
          %209 = sbr.rel (%p207) target = $region44
        $region43: #{tpu_custom_call.1} parent=39 // pred_region
          %210 = dma.done [#allocation3], 512
        $region44: #{tpu_custom_call.1} parent=39 // pred_fallthru
          _
        %p211 = scmp.lt.s32.totalorder %s20, 1
        %s212 = scalar_select %p211, %s20, 1
        %s213 = smul.addr %s212, 2
        %s214 = smul.addr %s213, 4
        %s215 = scalar_lea.vmem %s0, %s214
        %p216 = pneg %p41
        %p217 = pneg %p38
        %p218 = pneg %p62
        %p219 = pneg %p59
        %p220 = pneg %p83
        %p221 = pneg %p80
        %p222 = pneg %p104
        %p223 = pneg %p101
        %p224 = pneg %p125
        %p225 = pneg %p122
        %p226 = pneg %p151
        %p227 = pneg %p148
        %s228 = sand.u32 %s138, 1
        %s229 = scalar_lea.sflag [#allocation4], %s228
        %s230 = sand.u32 %s138, 1
        %s231 = smul.addr %s230, 64
        %s232 = scalar_lea.vmem [#allocation5], %s231
        %p233 = scmp.lt.s32.totalorder %s20, 1
        %s234 = scalar_select %p233, %s20, 1
        %s235 = smul.addr %s234, 2
        %s236 = smul.addr %s235, 4
        %s237 = scalar_lea.vmem %s0, %s236
        %v238 = vld [vmem:[%s1] sm:$0xff]
        %v239 = vld [vmem:[%s237] sm:$0xff]
        %v241 = vcombine.high %v239, %v239
        %vm242 = vcmask 31744
        %v244 = vsel %vm242, %v238, 0
        %vm246 = vcmask 1043456
        %v247 = vsel %vm246, %v239, 0
        %v249 = vsel %vm246, %v241, 0
        %251 = vmatprep.subr.mxu0 0.0
        %252 = vmatpush1.msra.mxu0 0.0
        %253 = vmatprep.subr.mxu0 0.0
        %254 = vmatpush1.msra.mxu0 0.0
        %255 = vmatprep.subr.mxu0 0.0
        %256 = vmatpush1.msra.mxu0 0.0
        %257 = vmatprep.subr.mxu0 0.0
        %258 = vmatpush1.msra.mxu0 0.0
        %259 = vmatprep.subr.mxu0 0.0
        %260 = vmatpush1.msra.mxu0 0.0
        %261 = vmatprep.subr.mxu0 0.0
        %262 = vmatpush1.msra.mxu0 0.0
        %263 = vmatprep.subr.mxu0 0.0
        %264 = vmatpush1.msra.mxu0 0.0
        %265 = vmatprep.subr.mxu0 0.0
        %266 = vmatpush1.msra.mxu0 0.0
        %267 = vmatprep.subr.mxu0 0.0
        %268 = vmatpush1.msra.mxu0 0.0
        %269 = vmatprep.subr.mxu0 0.0
        %270 = vmatpush1.msra.mxu0 0.0
        %271 = vmatprep.subr.mxu0 0.0
        %272 = vmatpush1.msra.mxu0 0.0
        %273 = vmatprep.subr.mxu0 0.0
        %274 = vmatpush1.msra.mxu0 0.0
        %275 = vmatprep.subr.mxu0 0.0
        %276 = vmatpush1.msra.mxu0 0.0
        %277 = vmatprep.subr.mxu0 0.0
        %278 = vmatpush1.msra.mxu0 0.0
        %279 = vmatprep.subr.mxu0 0.0
        %280 = vmatpush1.msra.mxu0 0.0
        %281 = vmatprep.subr.mxu0 %v249
        %282 = vmatpush1.msra.mxu0 %v247
        %283 = vmatprep.subr.mxu0 0.0
        %284 = vmatpush2.msra.mxu0 0.0
        %285 = vmatprep.subr.mxu0 0.0
        %286 = vmatpush2.msra.mxu0 0.0
        %287 = vmatprep.subr.mxu0 0.0
        %288 = vmatpush2.msra.mxu0 0.0
        %289 = vmatprep.subr.mxu0 0.0
        %290 = vmatpush2.msra.mxu0 0.0
        %291 = vmatprep.subr.mxu0 0.0
        %292 = vmatpush2.msra.mxu0 0.0
        %293 = vmatprep.subr.mxu0 0.0
        %294 = vmatpush2.msra.mxu0 0.0
        %295 = vmatprep.subr.mxu0 0.0
        %296 = vmatpush2.msra.mxu0 0.0
        %297 = vmatprep.subr.mxu0 0.0
        %298 = vmatpush2.msra.mxu0 0.0
        %299 = vmatprep.subr.mxu0 0.0
        %300 = vmatpush2.msra.mxu0 0.0
        %301 = vmatprep.subr.mxu0 0.0
        %302 = vmatpush2.msra.mxu0 0.0
        %303 = vmatprep.subr.mxu0 0.0
        %304 = vmatpush2.msra.mxu0 0.0
        %305 = vmatprep.subr.mxu0 0.0
        %306 = vmatpush2.msra.mxu0 0.0
        %307 = vmatprep.subr.mxu0 0.0
        %308 = vmatpush2.msra.mxu0 0.0
        %309 = vmatprep.subr.mxu0 0.0
        %310 = vmatpush2.msra.mxu0 0.0
        %311 = vmatprep.subr.mxu0 0.0
        %312 = vmatpush2.msra.mxu0 0.0
        %313 = vmatprep.subr.mxu0 0.0
        %314 = vmatpush2.msra.mxu0 0.0
        %315 = vmatprep.mubr.f32.mxu0 0.0
        %316 = vmatmul.mubr.f32.gmra.mxu0 %v244
        %v317 = vpop.f32.mrf.mxu0
        %v318 = vadd.f32 0.0, %v317
        %v319 = vpop.f32.mrf.mxu0
        %v320 = vadd.f32 0.0, %v319
        %321 = vdwg.mxu0
        %v322 = vmax.f32 %v318, 0.0
        %v323 = vmax.f32 %v320, 0.0
        %v324 = vld [vmem:[#allocation2] sm:$0xff]
        %v325 = vld [vmem:[#allocation2 + $0x8] sm:$0xff]
        %v326 = vld [vmem:[#allocation2 + $0x10] sm:$0x1]
        %v327 = vld [vmem:[#allocation2 + $0x18] sm:$0x1]
        %329 = vrot.lane.b32.xlu0 %v323, 17
        %v330 = vpop.permute.xlu0 %329
        %333 = vrot.lane.b32.xlu0 %v322, 17
        %v334 = vpop.permute.xlu0 %333
        %vm335 = vcmask 138240
        %v336 = vsel %vm335, %v334, %v330
        %v339 = vsel %vm335, %v330, %v334
        %v340 = vlaneseq
        %v341 = vshrl.u32 %v340, 7
        %v342 = vsub.s32 0, %v341
        %v343 = vrot.slane %v324, %v342
        %v344 = vlaneseq
        %v345 = vshrl.u32 %v344, 7
        %v346 = vsub.s32 0, %v345
        %v347 = vrot.slane %v325, %v346
        %v348 = vmul.f32 %v339, %v343
        %v349 = vmul.f32 %v336, %v347
        %350 = vrot.lane.b32.xlu0 %v323, 16
        %v351 = vpop.permute.xlu0 %350
        %353 = vrot.lane.b32.xlu0 %v322, 16
        %v354 = vpop.permute.xlu0 %353
        %vm355 = vcmask 130048
        %v356 = vsel %vm355, %v354, %v351
        %v359 = vsel %vm355, %v351, %v354
        %v360 = vlaneseq
        %v361 = vshrl.u32 %v360, 7
        %v362 = vsub.s32 1, %v361
        %v363 = vrot.slane %v324, %v362
        %v364 = vlaneseq
        %v365 = vshrl.u32 %v364, 7
        %v366 = vsub.s32 1, %v365
        %v367 = vrot.slane %v325, %v366
        %v368 = vmul.f32 %v359, %v363
        %v369 = vmul.f32 %v356, %v367
        %370 = vrot.lane.b32.xlu0 %v323, 15
        %v371 = vpop.permute.xlu0 %370
        %373 = vrot.lane.b32.xlu0 %v322, 15
        %v374 = vpop.permute.xlu0 %373
        %vm375 = vcmask 121856
        %v376 = vsel %vm375, %v374, %v371
        %v379 = vsel %vm375, %v371, %v374
        %v380 = vlaneseq
        %v381 = vshrl.u32 %v380, 7
        %v382 = vsub.s32 2, %v381
        %v383 = vrot.slane %v324, %v382
        %v384 = vlaneseq
        %v385 = vshrl.u32 %v384, 7
        %v386 = vsub.s32 2, %v385
        %v387 = vrot.slane %v325, %v386
        %v388 = vmul.f32 %v379, %v383
        %v389 = vmul.f32 %v376, %v387
        %390 = vrot.lane.b32.xlu0 %v323, 1
        %v391 = vpop.permute.xlu0 %390
        %393 = vrot.lane.b32.xlu0 %v322, 1
        %v394 = vpop.permute.xlu0 %393
        %vm395 = vcmask 7168
        %v396 = vsel %vm395, %v394, %v391
        %v399 = vsel %vm395, %v391, %v394
        %v400 = vlaneseq
        %v401 = vshrl.u32 %v400, 7
        %v402 = vsub.s32 3, %v401
        %v403 = vrot.slane %v324, %v402
        %v404 = vlaneseq
        %v405 = vshrl.u32 %v404, 7
        %v406 = vsub.s32 3, %v405
        %v407 = vrot.slane %v325, %v406
        %v408 = vmul.f32 %v399, %v403
        %v409 = vmul.f32 %v396, %v407
        %410 = vrot.lane.b32.xlu0 %v322, 127
        %v411 = vpop.permute.xlu0 %410
        %412 = vrot.lane.b32.xlu0 %v323, 127
        %v413 = vpop.permute.xlu0 %412
        %vm414 = vcmask 1039360
        %v415 = vsel %vm414, %v411, %v413
        %v419 = vsel %vm414, %v413, %v411
        %v420 = vlaneseq
        %v421 = vshrl.u32 %v420, 7
        %v422 = vsub.s32 5, %v421
        %v423 = vrot.slane %v324, %v422
        %v424 = vlaneseq
        %v425 = vshrl.u32 %v424, 7
        %v426 = vsub.s32 5, %v425
        %v427 = vrot.slane %v325, %v426
        %v428 = vmul.f32 %v415, %v423
        %v429 = vmul.f32 %v419, %v427
        %430 = vrot.lane.b32.xlu0 %v322, 113
        %v431 = vpop.permute.xlu0 %430
        %432 = vrot.lane.b32.xlu0 %v323, 113
        %v433 = vpop.permute.xlu0 %432
        %vm434 = vcmask 924672
        %v435 = vsel %vm434, %v431, %v433
        %v439 = vsel %vm434, %v433, %v431
        %v440 = vlaneseq
        %v441 = vshrl.u32 %v440, 7
        %v442 = vsub.s32 6, %v441
        %v443 = vrot.slane %v324, %v442
        %v444 = vlaneseq
        %v445 = vshrl.u32 %v444, 7
        %v446 = vsub.s32 6, %v445
        %v447 = vrot.slane %v325, %v446
        %v448 = vmul.f32 %v435, %v443
        %v449 = vmul.f32 %v439, %v447
        %450 = vrot.lane.b32.xlu0 %v322, 112
        %v451 = vpop.permute.xlu0 %450
        %452 = vrot.lane.b32.xlu0 %v323, 112
        %v453 = vpop.permute.xlu0 %452
        %vm454 = vcmask 916480
        %v455 = vsel %vm454, %v451, %v453
        %v459 = vsel %vm454, %v453, %v451
        %v460 = vlaneseq
        %v461 = vshrl.u32 %v460, 7
        %v462 = vsub.s32 7, %v461
        %v463 = vrot.slane %v324, %v462
        %v464 = vlaneseq
        %v465 = vshrl.u32 %v464, 7
        %v466 = vsub.s32 7, %v465
        %v467 = vrot.slane %v325, %v466
        %v468 = vmul.f32 %v455, %v463
        %v469 = vmul.f32 %v459, %v467
        %470 = vrot.lane.b32.xlu0 %v322, 111
        %v471 = vpop.permute.xlu0 %470
        %472 = vrot.lane.b32.xlu0 %v323, 111
        %v473 = vpop.permute.xlu0 %472
        %vm474 = vcmask 908288
        %v475 = vsel %vm474, %v471, %v473
        %v479 = vsel %vm474, %v473, %v471
        %v480 = vlaneseq
        %v481 = vshrl.u32 %v480, 7
        %v482 = vsub.s32 0, %v481
        %v483 = vrot.slane %v326, %v482
        %v484 = vlaneseq
        %v485 = vshrl.u32 %v484, 7
        %v486 = vsub.s32 0, %v485
        %v487 = vrot.slane %v327, %v486
        %v488 = vmul.f32 %v475, %v483
        %v489 = vmul.f32 %v479, %v487
        %v490 = vld [vmem:[%s2] sm:$0xff]
        %v491 = vld [vmem:[%s2 + $0x8] sm:$0xff]
        %v492 = vld [vmem:[%s2 + $0x10] sm:$0xff]
        %v493 = vld [vmem:[%s2 + $0x18] sm:$0xff]
        %v494 = vld [vmem:[%s4] sm:$0xff]
        %v495 = vld [vmem:[%s4 + $0x8] sm:$0xff]
        %v496 = vld [vmem:[%s4 + $0x10] sm:$0xff]
        %v497 = vld [vmem:[%s4 + $0x18] sm:$0xff]
        %499 = vset.pattern.permute.xlu0 0
        %500 = vperm.xlu0 %499, %v494
        %v501 = vpop.permute.xlu0 %500
        %504 = vset.pattern.permute.xlu0 0
        %505 = vperm.xlu0 %504, %v495
        %v506 = vpop.permute.xlu0 %505
        %509 = vset.pattern.permute.xlu0 0
        %510 = vperm.xlu0 %509, %v496
        %v511 = vpop.permute.xlu0 %510
        %514 = vset.pattern.permute.xlu0 0
        %515 = vperm.xlu0 %514, %v497
        %v516 = vpop.permute.xlu0 %515
        %vm518 = vcmask 588800
        %v520 = vsel %vm518, %v490, 0
        %v523 = vsel %vm518, %v491, 0
        %v526 = vsel %vm518, %v492, 0
        %v529 = vsel %vm518, %v493, 0
        %531 = vmatprep.subr.mxu0 0.0
        %532 = vmatpush1.msra.mxu0 0.0
        %533 = vmatprep.subr.mxu0 0.0
        %534 = vmatpush1.msra.mxu0 0.0
        %535 = vmatprep.subr.mxu0 0.0
        %536 = vmatpush1.msra.mxu0 0.0
        %537 = vmatprep.subr.mxu0 0.0
        %538 = vmatpush1.msra.mxu0 0.0
        %539 = vmatprep.subr.mxu0 0.0
        %540 = vmatpush1.msra.mxu0 0.0
        %541 = vmatprep.subr.mxu0 0.0
        %542 = vmatpush1.msra.mxu0 0.0
        %543 = vmatprep.subr.mxu0 0.0
        %544 = vmatpush1.msra.mxu0 0.0
        %545 = vmatprep.subr.mxu0 %v489
        %546 = vmatpush1.msra.mxu0 %v488
        %547 = vmatprep.subr.mxu0 %v469
        %548 = vmatpush1.msra.mxu0 %v468
        %549 = vmatprep.subr.mxu0 %v449
        %550 = vmatpush1.msra.mxu0 %v448
        %551 = vmatprep.subr.mxu0 %v429
        %552 = vmatpush1.msra.mxu0 %v428
        %553 = vmatprep.subr.mxu0 %v323
        %554 = vmatpush1.msra.mxu0 %v322
        %555 = vmatprep.subr.mxu0 %v409
        %556 = vmatpush1.msra.mxu0 %v408
        %557 = vmatprep.subr.mxu0 %v389
        %558 = vmatpush1.msra.mxu0 %v388
        %559 = vmatprep.subr.mxu0 %v369
        %560 = vmatpush1.msra.mxu0 %v368
        %561 = vmatprep.subr.mxu0 %v349
        %562 = vmatpush1.msra.mxu0 %v348
        %563 = vmatprep.subr.mxu0 0.0
        %564 = vmatpush2.msra.mxu0 0.0
        %565 = vmatprep.subr.mxu0 0.0
        %566 = vmatpush2.msra.mxu0 0.0
        %567 = vmatprep.subr.mxu0 0.0
        %568 = vmatpush2.msra.mxu0 0.0
        %569 = vmatprep.subr.mxu0 0.0
        %570 = vmatpush2.msra.mxu0 0.0
        %571 = vmatprep.subr.mxu0 0.0
        %572 = vmatpush2.msra.mxu0 0.0
        %573 = vmatprep.subr.mxu0 0.0
        %574 = vmatpush2.msra.mxu0 0.0
        %575 = vmatprep.subr.mxu0 0.0
        %576 = vmatpush2.msra.mxu0 0.0
        %577 = vmatprep.subr.mxu0 0.0
        %578 = vmatpush2.msra.mxu0 0.0
        %579 = vmatprep.subr.mxu0 0.0
        %580 = vmatpush2.msra.mxu0 0.0
        %581 = vmatprep.subr.mxu0 0.0
        %582 = vmatpush2.msra.mxu0 0.0
        %583 = vmatprep.subr.mxu0 0.0
        %584 = vmatpush2.msra.mxu0 0.0
        %585 = vmatprep.subr.mxu0 0.0
        %586 = vmatpush2.msra.mxu0 0.0
        %587 = vmatprep.subr.mxu0 0.0
        %588 = vmatpush2.msra.mxu0 0.0
        %589 = vmatprep.subr.mxu0 0.0
        %590 = vmatpush2.msra.mxu0 0.0
        %591 = vmatprep.subr.mxu0 0.0
        %592 = vmatpush2.msra.mxu0 0.0
        %593 = vmatprep.subr.mxu0 0.0
        %594 = vmatpush2.msra.mxu0 0.0
        %595 = vmatprep.mubr.f32.mxu0 0.0
        %596 = vmatmul.mubr.f32.gmra.mxu0 %v520
        %v597 = vpop.f32.mrf.mxu0
        %v598 = vadd.f32 %v501, %v597
        %v599 = vpop.f32.mrf.mxu0
        %v600 = vadd.f32 %v501, %v599
        %601 = vmatprep.mubr.f32.mxu0 0.0
        %602 = vmatmul.mubr.f32.gmra.mxu0 %v523
        %v603 = vpop.f32.mrf.mxu0
        %v604 = vadd.f32 %v506, %v603
        %v605 = vpop.f32.mrf.mxu0
        %v606 = vadd.f32 %v506, %v605
        %607 = vmatprep.mubr.f32.mxu0 0.0
        %608 = vmatmul.mubr.f32.gmra.mxu0 %v526
        %v609 = vpop.f32.mrf.mxu0
        %v610 = vadd.f32 %v511, %v609
        %v611 = vpop.f32.mrf.mxu0
        %v612 = vadd.f32 %v511, %v611
        %613 = vmatprep.mubr.f32.mxu0 0.0
        %614 = vmatmul.mubr.f32.gmra.mxu0 %v529
        %v615 = vpop.f32.mrf.mxu0
        %v616 = vadd.f32 %v516, %v615
        %v617 = vpop.f32.mrf.mxu0
        %v618 = vadd.f32 %v516, %v617
        %619 = vdwg.mxu0
        %v620 = vmax.f32 %v598, 0.0
        %v621 = vmax.f32 %v600, 0.0
        %v622 = vmax.f32 %v604, 0.0
        %v623 = vmax.f32 %v606, 0.0
        %v624 = vmax.f32 %v610, 0.0
        %v625 = vmax.f32 %v612, 0.0
        %v626 = vmax.f32 %v616, 0.0
        %v627 = vmax.f32 %v618, 0.0
        %628 = vst [vmem:[%s232] sm:$0xff] %v620
        %629 = vst [vmem:[%s232 + $0x8] sm:$0xff] %v621
        %630 = vst [vmem:[%s232 + $0x10] sm:$0xff] %v622
        %631 = vst [vmem:[%s232 + $0x18] sm:$0xff] %v623
        %632 = vst [vmem:[%s232 + $0x20] sm:$0xff] %v624
        %633 = vst [vmem:[%s232 + $0x28] sm:$0xff] %v625
        %634 = vst [vmem:[%s232 + $0x30] sm:$0xff] %v626
        %635 = vst [vmem:[%s232 + $0x38] sm:$0xff] %v627
        %s636 = sand.u32 %s138, 1
        %s637 = scalar_lea.sflag [#allocation4], %s636
        %s638 = sand.u32 %s138, 1
        %s639 = smul.addr %s638, 64
        %s640 = scalar_lea.vmem [#allocation5], %s639
        // Predicated region
        $region45: #{tpu_custom_call.1} parent=39 // pred_check
          %p641 = pneg %p148
        $region46: #{tpu_custom_call.1} parent=39 // pred_check_branch
          %643 = sbr.rel (%p641) target = $region48
        $region47: #{tpu_custom_call.1} parent=39 // pred_region
          %s645 = ssub.s32 1024, 1024
          %646 = vsyncadd %s637, %s645
          %s647 = smul.addr %s20, 8
          %s648 = smul.addr %s647, 128
          %s649 = scalar_lea.hbm %s5, %s648
          %s650 = sshll.u32 %s640, 4
          %s651 = int_to_ptr.vmem [resolvable:$true] %s650
          %656 = dma.vmem_to_hbm [thread:$0]  %s651, 1024, %s649, %s637, 256, 256, 16
        $region48: #{tpu_custom_call.1} parent=39 // pred_fallthru
          _
      $region40: #{tpu_custom_call.1} parent=5 // pred_fallthru
        _
      %p657 = scmp.le.s32.totalorder 2, %s15
      // Predicated region
      $region49: #{tpu_custom_call.1} parent=5 // pred_check
        %p658 = pneg %p657
      $region50: #{tpu_custom_call.1} parent=5 // pred_check_branch
        %660 = sbr.rel (%p658) target = $region52
      $region51: #{tpu_custom_call.1} parent=5 // pred_region
        %s661 = ssub.s32 %s15, 2
        // Predicated region
        $region53: #{tpu_custom_call.1} parent=51 // pred_check
          %p662 = pneg %p154
        $region54: #{tpu_custom_call.1} parent=51 // pred_check_branch
          %664 = sbr.rel (%p662) target = $region56
        $region55: #{tpu_custom_call.1} parent=51 // pred_region
          %s665 = sand.u32 %s139, 1
          %s666 = scalar_lea.sflag [#allocation4], %s665
          %s667 = sand.u32 %s139, 1
          %s668 = smul.addr %s667, 64
          %s669 = scalar_lea.vmem [#allocation5], %s668
          %670 = dma.done %s666, 1024
        $region56: #{tpu_custom_call.1} parent=51 // pred_fallthru
          _
      $region52: #{tpu_custom_call.1} parent=5 // pred_fallthru
        _
    $region6: #{tpu_custom_call.1} parent=1 // loop_footer
      %s19 = sadd.s32 1, %s15
    $region7: #{tpu_custom_call.1} parent=1 // loop_footer_branch
      %14 = sbr.rel target = $region3
    $region8: #{tpu_custom_call.1} parent=1 // loop_exit
      _
    %671 = vsyncpa [#allocation3], 1
    %s672 = scalar_lea.sflag [#allocation3], 1
    %673 = vsyncpa %s672, 1
    %674 = vsyncpa [#allocation4], 1
    %s675 = scalar_lea.sflag [#allocation4], 1
    %676 = vsyncpa %s675, 1

</llo_original>
